<compile_context>
chip_gen: v7x
topology: tpu7x:2x2x1
jax: 0.10.0
libtpu: 0.0.40
codegen_flags: <defaults>
</compile_context>

<pallas_src>
import jax
import jax.numpy as jnp
from jax.experimental import pallas as pl
from jax.experimental.pallas import tpu as pltpu


N_ACT_PAD = 128  # lane-dense padding of the 2-way logits output


def view_actor_kernel(x_ref, w1_ref, b1_ref, w2_ref, b2_ref, w3_ref, b3_ref,
                      o_ref):
    # fc1 + ReLU: bf16 operands, f32 accumulation on the MXU.
    h1 = jnp.dot(x_ref[...], w1_ref[...], preferred_element_type=jnp.float32)
    h1 = jnp.maximum(h1 + b1_ref[...], 0.0).astype(jnp.bfloat16)

    # fc2 + ReLU.
    h2 = jnp.dot(h1, w2_ref[...], preferred_element_type=jnp.float32)
    h2 = jnp.maximum(h2 + b2_ref[...], 0.0).astype(jnp.bfloat16)

    # fc3 -> logits padded to 128 lanes (only the first n_act columns are
    # real; the rest multiply zero weights). Lane-dense f32 store.
    logits = jnp.dot(h2, w3_ref[...], preferred_element_type=jnp.float32)
    o_ref[...] = logits + b3_ref[...]

    # NOTE: softmax(dim=-2) reduces over the batch axis and therefore lives
    # outside this batch-tiled kernel (see view_actor_forward).


def view_actor_forward(state, params, *, block_rows=256):
    """Returns the Categorical probabilities produced by the torch module
    (softmax over dim=-2 of the 3-layer MLP logits)."""
    w1, b1, w2, b2, w3, b3 = params
    B, D = state.shape
    F1 = w1.shape[1]
    F2 = w2.shape[1]
    n_act = w3.shape[1]

    # Batch tile: multiple of 8 sublanes; full batch if it is small.
    if B <= block_rows:
        tb = B
    else:
        tb = max(8, (block_rows // 8) * 8)
    grid = (pl.cdiv(B, tb),)

    # bf16 matmul operands (halves the dominant 256x256 weight DMA and uses
    # the MXU's native bf16 path); biases stay f32 for the VPU adds.
    x_bf = state.astype(jnp.bfloat16)
    w1_bf = w1.astype(jnp.bfloat16)
    w2_bf = w2.astype(jnp.bfloat16)
    w3_pad = jnp.zeros((F2, N_ACT_PAD), jnp.bfloat16)
    w3_pad = w3_pad.at[:, :n_act].set(w3.astype(jnp.bfloat16))
    b1r = b1.reshape(1, F1).astype(jnp.float32)
    b2r = b2.reshape(1, F2).astype(jnp.float32)
    b3_pad = jnp.zeros((1, N_ACT_PAD), jnp.float32)
    b3_pad = b3_pad.at[0, :n_act].set(b3.astype(jnp.float32))

    # Weights/biases: constant block index -> fetched once, VMEM-resident
    # across all batch tiles.
    resident = lambda shape: pl.BlockSpec(shape, lambda i: (0, 0))

    logits_pad = pl.pallas_call(
        view_actor_kernel,
        out_shape=jax.ShapeDtypeStruct((B, N_ACT_PAD), jnp.float32),
        grid=grid,
        in_specs=[
            pl.BlockSpec((tb, D), lambda i: (i, 0)),   # x: tiled over batch
            resident((D, F1)),
            resident((1, F1)),
            resident((F1, F2)),
            resident((1, F2)),
            resident((F2, N_ACT_PAD)),
            resident((1, N_ACT_PAD)),
        ],
        out_specs=pl.BlockSpec((tb, N_ACT_PAD), lambda i: (i, 0)),
        compiler_params=pltpu.CompilerParams(
            dimension_semantics=("parallel",)),  # tiles independent -> megacore
    )(x_bf, w1_bf, b1r, w2_bf, b2r, w3_pad, b3_pad)

    # Second pass over the FULL batch: softmax over dim=-2, exactly as the
    # torch nn.Softmax(dim=-2) in the reference module. O(B*2) -> negligible.
    logits = logits_pad[:, :n_act]
    return jax.nn.softmax(logits, axis=-2)


def init_params(key, input_dim, fc1_dims=256, fc2_dims=256, n_actions=2):
    """Deterministic init mimicking torch.nn.Linear default:
    U(-1/sqrt(fan_in), 1/sqrt(fan_in)) for both weight and bias."""
    def linear(k, fan_in, fan_out):
        kw, kb = jax.random.split(k)
        bound = 1.0 / jnp.sqrt(jnp.float32(fan_in))
        w = jax.random.uniform(kw, (fan_in, fan_out), jnp.float32,
                               -bound, bound)
        b = jax.random.uniform(kb, (fan_out,), jnp.float32, -bound, bound)
        return w, b

    k1, k2, k3 = jax.random.split(key, 3)
    w1, b1 = linear(k1, input_dim, fc1_dims)
    w2, b2 = linear(k2, fc1_dims, fc2_dims)
    w3, b3 = linear(k3, fc2_dims, n_actions)
    return (w1, b1, w2, b2, w3, b3)


def reference_forward_f32(state, params):
    """Pure-f32 JAX reference of the PyTorch forward (Categorical probs)."""
    w1, b1, w2, b2, w3, b3 = params
    h1 = jnp.maximum(state @ w1 + b1, 0.0)
    h2 = jnp.maximum(h1 @ w2 + b2, 0.0)
    logits = h2 @ w3 + b3
    return jax.nn.softmax(logits, axis=-2)


def reference_forward_bf16(state, params):
    """Reference with the same bf16-operand / f32-accumulate recipe as the
    kernel (for a tight numerical comparison)."""
    w1, b1, w2, b2, w3, b3 = params
    h1 = jnp.dot(state.astype(jnp.bfloat16), w1.astype(jnp.bfloat16),
                 preferred_element_type=jnp.float32) + b1
    h1 = jnp.maximum(h1, 0.0)
    h2 = jnp.dot(h1.astype(jnp.bfloat16), w2.astype(jnp.bfloat16),
                 preferred_element_type=jnp.float32) + b2
    h2 = jnp.maximum(h2, 0.0)
    logits = jnp.dot(h2.astype(jnp.bfloat16), w3.astype(jnp.bfloat16),
                     preferred_element_type=jnp.float32) + b3
    return jax.nn.softmax(logits, axis=-2)


if __name__ == "__main__":
    key = jax.random.PRNGKey(0)
    k_state, k_params = jax.random.split(key)

    B = 256          # batch of states (2 grid tiles of 128 rows)
    input_dim = 32   # input_dims = (32,)

    state = jax.random.normal(k_state, (B, input_dim), dtype=jnp.float32)
    params = init_params(k_params, input_dim)

    probs = view_actor_forward(state, params, block_rows=128)
    probs = jax.block_until_ready(probs)

    ref_bf16 = reference_forward_bf16(state, params)
    ref_f32 = reference_forward_f32(state, params)

    assert probs.shape == (B, 2)
    # Tight check against the bf16-matched reference.
    assert jnp.allclose(probs, ref_bf16, atol=1e-4, rtol=1e-3), \
        "mismatch vs bf16 reference"
    # Loose check against the full-f32 reference (bf16 operand rounding).
    assert jnp.allclose(probs, ref_f32, atol=1e-3, rtol=5e-2), \
        "mismatch vs f32 reference"
    # Softmax over dim=-2: each column sums to 1, like the torch module.
    assert jnp.allclose(jnp.sum(probs, axis=-2), jnp.ones((2,)), atol=1e-4)

    print("KERNEL_OK")
</pallas_src>

<mosaic_0001>
module attributes {stable_mosaic.version = 11 : i64} {
  func.func @view_actor_kernel(%arg0: i32, %arg1: memref<128x32xbf16, #tpu.memory_space<vmem>>, %arg2: memref<32x256xbf16, #tpu.memory_space<vmem>>, %arg3: memref<1x256xf32, #tpu.memory_space<vmem>>, %arg4: memref<256x256xbf16, #tpu.memory_space<vmem>>, %arg5: memref<1x256xf32, #tpu.memory_space<vmem>>, %arg6: memref<256x128xbf16, #tpu.memory_space<vmem>>, %arg7: memref<1x128xf32, #tpu.memory_space<vmem>>, %arg8: memref<128x128xf32, #tpu.memory_space<vmem>>) attributes {dimension_semantics = [#tpu.dimension_semantics<parallel>], iteration_bounds = array<i64: 2>, scalar_prefetch = 0 : i64, scratch_operands = 0 : i64, tpu.core_type = #tpu.core_type<tc>, window_params = [{transform_indices = @transform_0, window_bounds = array<i64: 128, 32>}, {pipeline_mode = #tpu.pipeline_mode<synchronous>, transform_indices = @transform_1, window_bounds = array<i64: 32, 256>}, {pipeline_mode = #tpu.pipeline_mode<synchronous>, transform_indices = @transform_2, window_bounds = array<i64: 1, 256>}, {pipeline_mode = #tpu.pipeline_mode<synchronous>, transform_indices = @transform_3, window_bounds = array<i64: 256, 256>}, {pipeline_mode = #tpu.pipeline_mode<synchronous>, transform_indices = @transform_4, window_bounds = array<i64: 1, 256>}, {pipeline_mode = #tpu.pipeline_mode<synchronous>, transform_indices = @transform_5, window_bounds = array<i64: 256, 128>}, {pipeline_mode = #tpu.pipeline_mode<synchronous>, transform_indices = @transform_6, window_bounds = array<i64: 1, 128>}, {transform_indices = @transform_7, window_bounds = array<i64: 128, 128>}]} {
    %c0 = arith.constant 0 : index
    %c0_0 = arith.constant 0 : index
    %0 = vector.load %arg1[%c0, %c0_0] : memref<128x32xbf16, #tpu.memory_space<vmem>>, vector<128x32xbf16>
    %c0_1 = arith.constant 0 : index
    %c0_2 = arith.constant 0 : index
    %1 = vector.load %arg2[%c0_1, %c0_2] : memref<32x256xbf16, #tpu.memory_space<vmem>>, vector<32x256xbf16>
    %cst = arith.constant dense<0.000000e+00> : vector<128x256xf32>
    %2 = tpu.matmul %0, %1, %cst {dimension_numbers = #tpu.dot_dimension_numbers<[1], [0], [0], [1], [0, 0, 1, 1], [], []>} : vector<128x32xbf16>, vector<32x256xbf16>, vector<128x256xf32> -> vector<128x256xf32>
    %c0_3 = arith.constant 0 : index
    %c0_4 = arith.constant 0 : index
    %3 = vector.load %arg3[%c0_3, %c0_4] : memref<1x256xf32, #tpu.memory_space<vmem>>, vector<1x256xf32>
    %4 = vector.broadcast %3 : vector<1x256xf32> to vector<128x256xf32>
    %5 = arith.addf %2, %4 : vector<128x256xf32>
    %cst_5 = arith.constant 0.000000e+00 : f32
    %6 = vector.broadcast %cst_5 : f32 to vector<128x256xf32>
    %7 = arith.maximumf %5, %6 : vector<128x256xf32>
    %8 = arith.truncf %7 : vector<128x256xf32> to vector<128x256xbf16>
    %c0_6 = arith.constant 0 : index
    %c0_7 = arith.constant 0 : index
    %9 = vector.load %arg4[%c0_6, %c0_7] : memref<256x256xbf16, #tpu.memory_space<vmem>>, vector<256x256xbf16>
    %cst_8 = arith.constant dense<0.000000e+00> : vector<128x256xf32>
    %10 = tpu.matmul %8, %9, %cst_8 {dimension_numbers = #tpu.dot_dimension_numbers<[1], [0], [0], [1], [0, 0, 1, 1], [], []>} : vector<128x256xbf16>, vector<256x256xbf16>, vector<128x256xf32> -> vector<128x256xf32>
    %c0_9 = arith.constant 0 : index
    %c0_10 = arith.constant 0 : index
    %11 = vector.load %arg5[%c0_9, %c0_10] : memref<1x256xf32, #tpu.memory_space<vmem>>, vector<1x256xf32>
    %12 = vector.broadcast %11 : vector<1x256xf32> to vector<128x256xf32>
    %13 = arith.addf %10, %12 : vector<128x256xf32>
    %cst_11 = arith.constant 0.000000e+00 : f32
    %14 = vector.broadcast %cst_11 : f32 to vector<128x256xf32>
    %15 = arith.maximumf %13, %14 : vector<128x256xf32>
    %16 = arith.truncf %15 : vector<128x256xf32> to vector<128x256xbf16>
    %c0_12 = arith.constant 0 : index
    %c0_13 = arith.constant 0 : index
    %17 = vector.load %arg6[%c0_12, %c0_13] : memref<256x128xbf16, #tpu.memory_space<vmem>>, vector<256x128xbf16>
    %cst_14 = arith.constant dense<0.000000e+00> : vector<128x128xf32>
    %18 = tpu.matmul %16, %17, %cst_14 {dimension_numbers = #tpu.dot_dimension_numbers<[1], [0], [0], [1], [0, 0, 1, 1], [], []>} : vector<128x256xbf16>, vector<256x128xbf16>, vector<128x128xf32> -> vector<128x128xf32>
    %c0_15 = arith.constant 0 : index
    %c0_16 = arith.constant 0 : index
    %19 = vector.load %arg7[%c0_15, %c0_16] : memref<1x128xf32, #tpu.memory_space<vmem>>, vector<1x128xf32>
    %20 = vector.broadcast %19 : vector<1x128xf32> to vector<128x128xf32>
    %21 = arith.addf %18, %20 : vector<128x128xf32>
    %c0_17 = arith.constant 0 : index
    %c0_18 = arith.constant 0 : index
    %22 = vector.load %arg8[%c0_17, %c0_18] : memref<128x128xf32, #tpu.memory_space<vmem>>, vector<128x128xf32>
    tpu.vector_store %arg8[%c0_17, %c0_18], %21 {strides = array<i32>} : memref<128x128xf32, #tpu.memory_space<vmem>>, vector<128x128xf32>,
    return
  }
  func.func @transform_0(%arg0: i32) -> (i32, i32) {
    %c0_i32 = arith.constant 0 : i32
    %c0_i32_0 = arith.constant 0 : i32
    return %arg0, %c0_i32 : i32, i32
  }
  func.func @transform_1(%arg0: i32) -> (i32, i32) {
    %c0_i32 = arith.constant 0 : i32
    %c0_i32_0 = arith.constant 0 : i32
    %c0_i32_1 = arith.constant 0 : i32
    return %c0_i32, %c0_i32_0 : i32, i32
  }
  func.func @transform_2(%arg0: i32) -> (i32, i32) {
    %c0_i32 = arith.constant 0 : i32
    %c0_i32_0 = arith.constant 0 : i32
    %c0_i32_1 = arith.constant 0 : i32
    return %c0_i32, %c0_i32_0 : i32, i32
  }
  func.func @transform_3(%arg0: i32) -> (i32, i32) {
    %c0_i32 = arith.constant 0 : i32
    %c0_i32_0 = arith.constant 0 : i32
    %c0_i32_1 = arith.constant 0 : i32
    return %c0_i32, %c0_i32_0 : i32, i32
  }
  func.func @transform_4(%arg0: i32) -> (i32, i32) {
    %c0_i32 = arith.constant 0 : i32
    %c0_i32_0 = arith.constant 0 : i32
    %c0_i32_1 = arith.constant 0 : i32
    return %c0_i32, %c0_i32_0 : i32, i32
  }
  func.func @transform_5(%arg0: i32) -> (i32, i32) {
    %c0_i32 = arith.constant 0 : i32
    %c0_i32_0 = arith.constant 0 : i32
    %c0_i32_1 = arith.constant 0 : i32
    return %c0_i32, %c0_i32_0 : i32, i32
  }
  func.func @transform_6(%arg0: i32) -> (i32, i32) {
    %c0_i32 = arith.constant 0 : i32
    %c0_i32_0 = arith.constant 0 : i32
    %c0_i32_1 = arith.constant 0 : i32
    return %c0_i32, %c0_i32_0 : i32, i32
  }
  func.func @transform_7(%arg0: i32) -> (i32, i32) {
    %c0_i32 = arith.constant 0 : i32
    %c0_i32_0 = arith.constant 0 : i32
    return %arg0, %c0_i32 : i32, i32
  }
}

</mosaic_0001>

<llo_original>
// kernel: tpu_custom_call.1
$region0: #{tpu_custom_call.1}
  #allocation0 [shape = 'u32[]', space=smem, size = 0x4, offset = 0x4, fixed_abs, tag = 'smem constant byte address 0x4 - core index']
  #allocation1 [shape = 'u32[144,128]{1,0:T(1,128)}', space=vmem, size = 0x12000, scoped, tag = 'internal scratch']
  %s0 = inlined_call_operand.vmem [shape: bf16[256,32], index: 0, kind: input, shape index: {}]
  %s1 = inlined_call_operand.vmem [shape: bf16[32,256], index: 1, kind: input, shape index: {}]
  %s2 = inlined_call_operand.vmem [shape: f32[1,256], index: 2, kind: input, shape index: {}]
  %s3 = inlined_call_operand.hbm [shape: bf16[256,256], index: 3, kind: input, shape index: {}]
  %s4 = inlined_call_operand.vmem [shape: f32[1,256], index: 4, kind: input, shape index: {}]
  %s5 = inlined_call_operand.vmem [shape: bf16[256,128], index: 5, kind: input, shape index: {}]
  %s6 = inlined_call_operand.vmem [shape: f32[1,128], index: 6, kind: input, shape index: {}]
  %s7 = inlined_call_operand.hbm [shape: f32[256,128], index: 7, kind: output, shape index: {}]
  %s8 = sld [smem:[#allocation0]]
  $region65: #{tpu_custom_call.1} parent=0
    _
  %s10 = ssub.s32 1, %s8
  %s11 = scalar_select 0, %s10, %s8
  $region1: #{tpu_custom_call.1} parent=0
    #allocation2 [shape = 'u8[131072]{0}', space=vmem, size = 0x20000, scoped, tag = 'input window, operand 3, single buffered']
    #allocation3 [shape = 's32[2]{0}', space=sflag, size = 0x8, scoped, tag = 'scoped memory for tpu_custom_call.1']
    #allocation4 [shape = 's32[2]{0}', space=sflag, size = 0x8, scoped, tag = 'scoped memory for tpu_custom_call.1']
    #allocation5 [shape = 'u8[131072]{0}', space=vmem, size = 0x20000, scoped, tag = 'output window, operand 0']
    %12 = vsyncpa [#allocation3], 0
    %13 = vsyncpa [#allocation4], 0
    %s14 = scalar_lea.sflag [#allocation4], 1
    %15 = vsyncpa %s14, 0
    loop: start=0, step=1, limit=4
    $region2: #{tpu_custom_call.1} parent=1 // loop_pre_header
      _
    $region3: #{tpu_custom_call.1} parent=1 // loop_header
      %s17 = sphi 0, %s21
      %p18 = scmp.ge.s32.totalorder %s17, 4
      %s27 = sphi 0, %s29
      %s30 = sphi 0, %s27
      %s31 = sphi 0, %s30
      %s47 = sphi 0, %s31
      %s51 = sphi 0, %s51
      %s53 = sphi 0, %s51
      %s54 = sphi 0, %s53
      %s68 = sphi 0, %s54
      %s72 = sphi 0, %s72
      %s74 = sphi 0, %s72
      %s75 = sphi 0, %s74
      %s89 = sphi 0, %s75
      %s93 = sphi 0, %s93
      %s95 = sphi 0, %s93
      %s96 = sphi 0, %s95
      %s110 = sphi 0, %s96
      %s114 = sphi 0, %s114
      %s116 = sphi 0, %s114
      %s117 = sphi 0, %s116
      %s131 = sphi 0, %s117
      %s135 = sphi 0, %s135
      %s137 = sphi 0, %s135
      %s138 = sphi 0, %s137
      %s152 = sphi 0, %s138
      %s156 = sphi 0, %s156
      %s158 = sphi 0, %s156
      %s159 = sphi 0, %s158
      %s173 = sphi 0, %s159
      %s179 = sphi 0, %s181
      %s182 = sphi 0, %s179
      %s183 = sphi 0, %s182
      %s199 = sphi 0, %s183
    $region4: #{tpu_custom_call.1} parent=1 // loop_header_branch
      %20 = sbr.rel (%p18) target = $region8
    $region5: #{tpu_custom_call.1} parent=1 // loop_body
      %s22 = ssub.s32 %s17, 1
      %s23 = ssub.s32 %s17, 2
      %s24 = sadd.s32 %s17, 1
      %s25 = ssub.s32 %s17, %s24
      %p26 = scmp.eq.s32.totalorder %s25, 0
      %s28 = sadd.s32 %s27, 1
      %s29 = scalar_select %p26, %s27, %s28
      %p32 = pneg %p26
      %p33 = scmp.eq.s32.totalorder %s17, 1
      %p34 = por %p32, %p33
      %p35 = scmp.ne.s32.totalorder %s27, %s30
      %p36 = scmp.eq.s32.totalorder %s17, 0
      %p37 = por %p35, %p36
      %p38 = scmp.ne.s32.totalorder %s27, %s30
      %p39 = scmp.eq.s32.totalorder %s22, 1
      %p40 = por %p38, %p39
      %p41 = scmp.ne.s32.totalorder %s30, %s31
      %p42 = scmp.eq.s32.totalorder %s22, 0
      %p43 = por %p41, %p42
      %p44 = scmp.ne.s32.totalorder %s30, %s31
      %p45 = scmp.eq.s32.totalorder %s23, 1
      %p46 = por %p44, %p45
      %p48 = scmp.ne.s32.totalorder %s31, %s47
      %p49 = scmp.eq.s32.totalorder %s23, 0
      %p50 = por %p48, %p49
      %s52 = sadd.s32 %s51, 1
      %p55 = scmp.eq.s32.totalorder %s17, 1
      %p56 = scmp.ne.s32.totalorder %s51, %s53
      %p57 = scmp.eq.s32.totalorder %s17, 0
      %p58 = por %p56, %p57
      %p59 = scmp.ne.s32.totalorder %s51, %s53
      %p60 = scmp.eq.s32.totalorder %s22, 1
      %p61 = por %p59, %p60
      %p62 = scmp.ne.s32.totalorder %s53, %s54
      %p63 = scmp.eq.s32.totalorder %s22, 0
      %p64 = por %p62, %p63
      %p65 = scmp.ne.s32.totalorder %s53, %s54
      %p66 = scmp.eq.s32.totalorder %s23, 1
      %p67 = por %p65, %p66
      %p69 = scmp.ne.s32.totalorder %s54, %s68
      %p70 = scmp.eq.s32.totalorder %s23, 0
      %p71 = por %p69, %p70
      %s73 = sadd.s32 %s72, 1
      %p76 = scmp.eq.s32.totalorder %s17, 1
      %p77 = scmp.ne.s32.totalorder %s72, %s74
      %p78 = scmp.eq.s32.totalorder %s17, 0
      %p79 = por %p77, %p78
      %p80 = scmp.ne.s32.totalorder %s72, %s74
      %p81 = scmp.eq.s32.totalorder %s22, 1
      %p82 = por %p80, %p81
      %p83 = scmp.ne.s32.totalorder %s74, %s75
      %p84 = scmp.eq.s32.totalorder %s22, 0
      %p85 = por %p83, %p84
      %p86 = scmp.ne.s32.totalorder %s74, %s75
      %p87 = scmp.eq.s32.totalorder %s23, 1
      %p88 = por %p86, %p87
      %p90 = scmp.ne.s32.totalorder %s75, %s89
      %p91 = scmp.eq.s32.totalorder %s23, 0
      %p92 = por %p90, %p91
      %s94 = sadd.s32 %s93, 1
      %p97 = scmp.eq.s32.totalorder %s17, 1
      %p98 = scmp.ne.s32.totalorder %s93, %s95
      %p99 = scmp.eq.s32.totalorder %s17, 0
      %p100 = por %p98, %p99
      %p101 = scmp.ne.s32.totalorder %s93, %s95
      %p102 = scmp.eq.s32.totalorder %s22, 1
      %p103 = por %p101, %p102
      %p104 = scmp.ne.s32.totalorder %s95, %s96
      %p105 = scmp.eq.s32.totalorder %s22, 0
      %p106 = por %p104, %p105
      %p107 = scmp.ne.s32.totalorder %s95, %s96
      %p108 = scmp.eq.s32.totalorder %s23, 1
      %p109 = por %p107, %p108
      %p111 = scmp.ne.s32.totalorder %s96, %s110
      %p112 = scmp.eq.s32.totalorder %s23, 0
      %p113 = por %p111, %p112
      %s115 = sadd.s32 %s114, 1
      %p118 = scmp.eq.s32.totalorder %s17, 1
      %p119 = scmp.ne.s32.totalorder %s114, %s116
      %p120 = scmp.eq.s32.totalorder %s17, 0
      %p121 = por %p119, %p120
      %p122 = scmp.ne.s32.totalorder %s114, %s116
      %p123 = scmp.eq.s32.totalorder %s22, 1
      %p124 = por %p122, %p123
      %p125 = scmp.ne.s32.totalorder %s116, %s117
      %p126 = scmp.eq.s32.totalorder %s22, 0
      %p127 = por %p125, %p126
      %p128 = scmp.ne.s32.totalorder %s116, %s117
      %p129 = scmp.eq.s32.totalorder %s23, 1
      %p130 = por %p128, %p129
      %p132 = scmp.ne.s32.totalorder %s117, %s131
      %p133 = scmp.eq.s32.totalorder %s23, 0
      %p134 = por %p132, %p133
      %s136 = sadd.s32 %s135, 1
      %p139 = scmp.eq.s32.totalorder %s17, 1
      %p140 = scmp.ne.s32.totalorder %s135, %s137
      %p141 = scmp.eq.s32.totalorder %s17, 0
      %p142 = por %p140, %p141
      %p143 = scmp.ne.s32.totalorder %s135, %s137
      %p144 = scmp.eq.s32.totalorder %s22, 1
      %p145 = por %p143, %p144
      %p146 = scmp.ne.s32.totalorder %s137, %s138
      %p147 = scmp.eq.s32.totalorder %s22, 0
      %p148 = por %p146, %p147
      %p149 = scmp.ne.s32.totalorder %s137, %s138
      %p150 = scmp.eq.s32.totalorder %s23, 1
      %p151 = por %p149, %p150
      %p153 = scmp.ne.s32.totalorder %s138, %s152
      %p154 = scmp.eq.s32.totalorder %s23, 0
      %p155 = por %p153, %p154
      %s157 = sadd.s32 %s156, 1
      %p160 = scmp.eq.s32.totalorder %s17, 1
      %p161 = scmp.ne.s32.totalorder %s156, %s158
      %p162 = scmp.eq.s32.totalorder %s17, 0
      %p163 = por %p161, %p162
      %p164 = scmp.ne.s32.totalorder %s156, %s158
      %p165 = scmp.eq.s32.totalorder %s22, 1
      %p166 = por %p164, %p165
      %p167 = scmp.ne.s32.totalorder %s158, %s159
      %p168 = scmp.eq.s32.totalorder %s22, 0
      %p169 = por %p167, %p168
      %p170 = scmp.ne.s32.totalorder %s158, %s159
      %p171 = scmp.eq.s32.totalorder %s23, 1
      %p172 = por %p170, %p171
      %p174 = scmp.ne.s32.totalorder %s159, %s173
      %p175 = scmp.eq.s32.totalorder %s23, 0
      %p176 = por %p174, %p175
      %s177 = ssub.s32 %s17, %s24
      %p178 = scmp.eq.s32.totalorder %s177, 0
      %s180 = sadd.s32 %s179, 1
      %s181 = scalar_select %p178, %s179, %s180
      %p184 = pneg %p178
      %p185 = scmp.eq.s32.totalorder %s17, 1
      %p186 = por %p184, %p185
      %p187 = scmp.ne.s32.totalorder %s179, %s182
      %p188 = scmp.eq.s32.totalorder %s17, 0
      %p189 = por %p187, %p188
      %p190 = scmp.ne.s32.totalorder %s179, %s182
      %p191 = scmp.eq.s32.totalorder %s22, 1
      %p192 = por %p190, %p191
      %p193 = scmp.ne.s32.totalorder %s182, %s183
      %p194 = scmp.eq.s32.totalorder %s22, 0
      %p195 = por %p193, %p194
      %p196 = scmp.ne.s32.totalorder %s182, %s183
      %p197 = scmp.eq.s32.totalorder %s23, 1
      %p198 = por %p196, %p197
      %p200 = scmp.ne.s32.totalorder %s183, %s199
      %p201 = scmp.eq.s32.totalorder %s23, 0
      %p202 = por %p200, %p201
      %p203 = scmp.le.s32.totalorder 1, %s17
      %p204 = scmp.lt.s32.totalorder %s17, 3
      %p205 = pnand %p203, %p204
      %p206 = pneg %p205
      // Predicated region
      $region9: #{tpu_custom_call.1} parent=5 // pred_check
        _
      $region10: #{tpu_custom_call.1} parent=5 // pred_check_branch
        %208 = sbr.rel (%p205) target = $region12
      $region11: #{tpu_custom_call.1} parent=5 // pred_region
        %s209 = ssub.s32 %s17, 1
        // Predicated region
        $region13: #{tpu_custom_call.1} parent=11 // pred_check
          %p210 = pneg %p64
        $region14: #{tpu_custom_call.1} parent=11 // pred_check_branch
          %212 = sbr.rel (%p210) target = $region16
        $region15: #{tpu_custom_call.1} parent=11 // pred_region
          _
        $region16: #{tpu_custom_call.1} parent=11 // pred_fallthru
          _
        // Predicated region
        $region17: #{tpu_custom_call.1} parent=11 // pred_check
          %p213 = pneg %p85
        $region18: #{tpu_custom_call.1} parent=11 // pred_check_branch
          %215 = sbr.rel (%p213) target = $region20
        $region19: #{tpu_custom_call.1} parent=11 // pred_region
          _
        $region20: #{tpu_custom_call.1} parent=11 // pred_fallthru
          _
        // Predicated region
        $region21: #{tpu_custom_call.1} parent=11 // pred_check
          %p216 = pneg %p106
        $region22: #{tpu_custom_call.1} parent=11 // pred_check_branch
          %218 = sbr.rel (%p216) target = $region24
        $region23: #{tpu_custom_call.1} parent=11 // pred_region
          %s220 = ssub.s32 4096, 4096
          %221 = vsyncadd [#allocation3], %s220
          %s222 = sshll.u32 [#allocation2], 4
          %s223 = int_to_ptr.vmem [resolvable:$true] %s222
          %228 = dma.hbm_to_vmem [thread:$0]  %s3, 4096, %s223, [#allocation3], 128, 128, 8
        $region24: #{tpu_custom_call.1} parent=11 // pred_fallthru
          _
        // Predicated region
        $region25: #{tpu_custom_call.1} parent=11 // pred_check
          %p229 = pneg %p127
        $region26: #{tpu_custom_call.1} parent=11 // pred_check_branch
          %231 = sbr.rel (%p229) target = $region28
        $region27: #{tpu_custom_call.1} parent=11 // pred_region
          _
        $region28: #{tpu_custom_call.1} parent=11 // pred_fallthru
          _
        // Predicated region
        $region29: #{tpu_custom_call.1} parent=11 // pred_check
          %p232 = pneg %p148
        $region30: #{tpu_custom_call.1} parent=11 // pred_check_branch
          %234 = sbr.rel (%p232) target = $region32
        $region31: #{tpu_custom_call.1} parent=11 // pred_region
          _
        $region32: #{tpu_custom_call.1} parent=11 // pred_fallthru
          _
        // Predicated region
        $region33: #{tpu_custom_call.1} parent=11 // pred_check
          %p235 = pneg %p169
        $region34: #{tpu_custom_call.1} parent=11 // pred_check_branch
          %237 = sbr.rel (%p235) target = $region36
        $region35: #{tpu_custom_call.1} parent=11 // pred_region
          _
        $region36: #{tpu_custom_call.1} parent=11 // pred_fallthru
          _
      $region12: #{tpu_custom_call.1} parent=5 // pred_fallthru
        _
      %p238 = scmp.lt.s32.totalorder %s17, 2
      // Predicated region
      $region37: #{tpu_custom_call.1} parent=5 // pred_check
        %p239 = pneg %p238
      $region38: #{tpu_custom_call.1} parent=5 // pred_check_branch
        %241 = sbr.rel (%p239) target = $region40
      $region39: #{tpu_custom_call.1} parent=5 // pred_region
        // Predicated region
        $region41: #{tpu_custom_call.1} parent=39 // pred_check
          %p242 = pneg %p37
        $region42: #{tpu_custom_call.1} parent=39 // pred_check_branch
          %244 = sbr.rel (%p242) target = $region44
        $region43: #{tpu_custom_call.1} parent=39 // pred_region
          %s245 = smul.u32 16, %s17
          %p246 = scmp.lt.s32.totalorder %s245, 31
          %s247 = scalar_select %p246, %s245, 31
          %s248 = smul.addr %s247, 4
          %s249 = scalar_lea.vmem %s0, %s248
          %s250 = smul.u32 16, %s17
        $region44: #{tpu_custom_call.1} parent=39 // pred_fallthru
          _
      $region40: #{tpu_custom_call.1} parent=5 // pred_fallthru
        _
      %p251 = scmp.le.s32.totalorder 1, %s17
      %p252 = scmp.lt.s32.totalorder %s17, 3
      %p253 = pnand %p251, %p252
      %p254 = pneg %p253
      // Predicated region
      $region45: #{tpu_custom_call.1} parent=5 // pred_check
        _
      $region46: #{tpu_custom_call.1} parent=5 // pred_check_branch
        %256 = sbr.rel (%p253) target = $region48
      $region47: #{tpu_custom_call.1} parent=5 // pred_region
        %s257 = ssub.s32 %s17, 1
        // Predicated region
        $region49: #{tpu_custom_call.1} parent=47 // pred_check
          %p258 = pneg %p106
        $region50: #{tpu_custom_call.1} parent=47 // pred_check_branch
          %260 = sbr.rel (%p258) target = $region52
        $region51: #{tpu_custom_call.1} parent=47 // pred_region
          %261 = dma.done [#allocation3], 4096
        $region52: #{tpu_custom_call.1} parent=47 // pred_fallthru
          _
        %s262 = smul.u32 16, %s22
        %p263 = scmp.lt.s32.totalorder %s262, 31
        %s264 = scalar_select %p263, %s262, 31
        %s265 = smul.addr %s264, 4
        %s266 = scalar_lea.vmem %s0, %s265
        %p267 = pneg %p43
        %p268 = pneg %p40
        %p269 = pneg %p64
        %p270 = pneg %p61
        %p271 = pneg %p85
        %p272 = pneg %p82
        %p273 = pneg %p106
        %p274 = pneg %p103
        %p275 = pneg %p127
        %p276 = pneg %p124
        %p277 = pneg %p148
        %p278 = pneg %p145
        %p279 = pneg %p169
        %p280 = pneg %p166
        %p281 = pneg %p195
        %p282 = pneg %p192
        %s283 = sand.u32 %s182, 1
        %s284 = scalar_lea.sflag [#allocation4], %s283
        %s285 = sand.u32 %s182, 1
        %s286 = smul.addr %s285, 128
        %s287 = scalar_lea.vmem [#allocation5], %s286
        %s288 = smul.u32 16, %s22
        %p289 = scmp.lt.s32.totalorder %s288, 31
        %s290 = scalar_select %p289, %s288, 31
        %s291 = smul.addr %s290, 4
        %s292 = scalar_lea.vmem %s0, %s291
        %s293 = smul.u32 16, %s22
        %s294 = smul.u32 16, %s22
        %v296 = vld [vmem:[%s292] sm:$0xf]
        %v297 = vld [vmem:[%s292 + $0x4] sm:$0xf]
        %v298 = vld [vmem:[%s292 + $0x8] sm:$0xf]
        %v299 = vld [vmem:[%s292 + $0xc] sm:$0xf]
        %v300 = vld [vmem:[%s292 + $0x10] sm:$0xf]
        %v301 = vld [vmem:[%s292 + $0x14] sm:$0xf]
        %v302 = vld [vmem:[%s292 + $0x18] sm:$0xf]
        %v303 = vld [vmem:[%s292 + $0x1c] sm:$0xf]
        %v304 = vld [vmem:[%s292 + $0x20] sm:$0xf]
        %v305 = vld [vmem:[%s292 + $0x24] sm:$0xf]
        %v306 = vld [vmem:[%s292 + $0x28] sm:$0xf]
        %v307 = vld [vmem:[%s292 + $0x2c] sm:$0xf]
        %v308 = vld [vmem:[%s292 + $0x30] sm:$0xf]
        %v309 = vld [vmem:[%s292 + $0x34] sm:$0xf]
        %v310 = vld [vmem:[%s292 + $0x38] sm:$0xf]
        %v311 = vld [vmem:[%s292 + $0x3c] sm:$0xf]
        %v312 = vld [vmem:[%s1] sm:$0xff]
        %v313 = vld [vmem:[%s1 + $0x8] sm:$0xff]
        %v314 = vld [vmem:[%s1 + $0x10] sm:$0xff]
        %v315 = vld [vmem:[%s1 + $0x18] sm:$0xff]
        %v316 = vld [vmem:[%s2] sm:$0x3]
        %v318 = vlaneseq
        %v319 = vshrl.u32 %v318, 7
        %v320 = vsub.s32 0, %v319
        %v321 = vrot.slane %v316, %v320
        %v322 = vlaneseq
        %v323 = vshrl.u32 %v322, 7
        %v324 = vsub.s32 1, %v323
        %v325 = vrot.slane %v316, %v324
        %v344 = vunpack.c.l.b16 %v296
        %v345 = vunpack.c.l.b16 %v297
        %v346 = vunpack.c.l.b16 %v298
        %v347 = vunpack.c.l.b16 %v299
        %v348 = vunpack.c.l.b16 %v300
        %v349 = vunpack.c.l.b16 %v301
        %v350 = vunpack.c.l.b16 %v302
        %v351 = vunpack.c.l.b16 %v303
        %v352 = vunpack.c.l.b16 %v304
        %v353 = vunpack.c.l.b16 %v305
        %v354 = vunpack.c.l.b16 %v306
        %v355 = vunpack.c.l.b16 %v307
        %v356 = vunpack.c.l.b16 %v308
        %v357 = vunpack.c.l.b16 %v309
        %v358 = vunpack.c.l.b16 %v310
        %v359 = vunpack.c.l.b16 %v311
        %v360 = vpack.c.b16 %v345, %v344
        %v361 = vpack.c.b16 %v347, %v346
        %v362 = vpack.c.b16 %v349, %v348
        %v363 = vpack.c.b16 %v351, %v350
        %v364 = vpack.c.b16 %v353, %v352
        %v365 = vpack.c.b16 %v355, %v354
        %v366 = vpack.c.b16 %v357, %v356
        %v367 = vpack.c.b16 %v359, %v358
        %v372 = vunpack.c.l.b16 %v312
        %v373 = vunpack.c.h.b16 %v312
        %v374 = vunpack.c.l.b16 %v313
        %v375 = vunpack.c.h.b16 %v313
        %v376 = vunpack.c.l.b16 %v314
        %v377 = vunpack.c.h.b16 %v314
        %v378 = vunpack.c.l.b16 %v315
        %v379 = vunpack.c.h.b16 %v315
        %v380 = vpack.c.b16 %v374, %v372
        %v381 = vpack.c.b16 %v375, %v373
        %v382 = vpack.c.b16 %v378, %v376
        %v383 = vpack.c.b16 %v379, %v377
        %vm388 = vcmask 261120
        %v390 = vsel %vm388, %v360, 0
        %v393 = vsel %vm388, %v361, 0
        %v396 = vsel %vm388, %v362, 0
        %v399 = vsel %vm388, %v363, 0
        %v402 = vsel %vm388, %v364, 0
        %v405 = vsel %vm388, %v365, 0
        %v408 = vsel %vm388, %v366, 0
        %v411 = vsel %vm388, %v367, 0
        %413 = vmatprep.subr.bf16.mxu0 %v381
        %414 = vmatpush1.bf16.msra.mxu0 %v380
        %415 = vmatprep.subr.bf16.mxu0 %v383
        %416 = vmatpush1.bf16.msra.mxu0 %v382
        %417 = vmatprep.subr.bf16.mxu0 0
        %418 = vmatpush1.bf16.msra.mxu0 0
        %419 = vmatprep.subr.bf16.mxu0 0
        %420 = vmatpush1.bf16.msra.mxu0 0
        %421 = vmatprep.subr.bf16.mxu0 0
        %422 = vmatpush1.bf16.msra.mxu0 0
        %423 = vmatprep.subr.bf16.mxu0 0
        %424 = vmatpush1.bf16.msra.mxu0 0
        %425 = vmatprep.subr.bf16.mxu0 0
        %426 = vmatpush1.bf16.msra.mxu0 0
        %427 = vmatprep.subr.bf16.mxu0 0
        %428 = vmatpush1.bf16.msra.mxu0 0
        %429 = vmatprep.subr.bf16.mxu0 0
        %430 = vmatpush1.bf16.msra.mxu0 0
        %431 = vmatprep.subr.bf16.mxu0 0
        %432 = vmatpush1.bf16.msra.mxu0 0
        %433 = vmatprep.subr.bf16.mxu0 0
        %434 = vmatpush1.bf16.msra.mxu0 0
        %435 = vmatprep.subr.bf16.mxu0 0
        %436 = vmatpush1.bf16.msra.mxu0 0
        %437 = vmatprep.subr.bf16.mxu0 0
        %438 = vmatpush1.bf16.msra.mxu0 0
        %439 = vmatprep.subr.bf16.mxu0 0
        %440 = vmatpush1.bf16.msra.mxu0 0
        %441 = vmatprep.subr.bf16.mxu0 0
        %442 = vmatpush1.bf16.msra.mxu0 0
        %443 = vmatprep.subr.bf16.mxu0 0
        %444 = vmatpush1.bf16.msra.mxu0 0
        %445 = vmatprep.mubr.bf16.mxu0 0
        %446 = vmatmul.mubr.bf16.gmra.mrb[0].mxu0 %v390
        %v447 = vpop.f32.mrb[0].mxu0
        %v448 = vadd.f32 %v321, %v447
        %v449 = vpop.f32.mrb[0].mxu0
        %v450 = vadd.f32 %v325, %v449
        %v451 = vpop.f32.mrb[0].mxu0
        %v452 = vadd.f32 %v321, %v451
        %v453 = vpop.f32.mrb[0].mxu0
        %v454 = vadd.f32 %v325, %v453
        %455 = vmatprep.mubr.bf16.mxu0 0
        %456 = vmatmul.mubr.bf16.gmra.mrb[0].mxu0 %v393
        %v457 = vpop.f32.mrb[0].mxu0
        %v458 = vadd.f32 %v321, %v457
        %v459 = vpop.f32.mrb[0].mxu0
        %v460 = vadd.f32 %v325, %v459
        %v461 = vpop.f32.mrb[0].mxu0
        %v462 = vadd.f32 %v321, %v461
        %v463 = vpop.f32.mrb[0].mxu0
        %v464 = vadd.f32 %v325, %v463
        %465 = vmatprep.mubr.bf16.mxu0 0
        %466 = vmatmul.mubr.bf16.gmra.mrb[0].mxu0 %v396
        %v467 = vpop.f32.mrb[0].mxu0
        %v468 = vadd.f32 %v321, %v467
        %v469 = vpop.f32.mrb[0].mxu0
        %v470 = vadd.f32 %v325, %v469
        %v471 = vpop.f32.mrb[0].mxu0
        %v472 = vadd.f32 %v321, %v471
        %v473 = vpop.f32.mrb[0].mxu0
        %v474 = vadd.f32 %v325, %v473
        %475 = vmatprep.mubr.bf16.mxu0 0
        %476 = vmatmul.mubr.bf16.gmra.mrb[0].mxu0 %v399
        %v477 = vpop.f32.mrb[0].mxu0
        %v478 = vadd.f32 %v321, %v477
        %v479 = vpop.f32.mrb[0].mxu0
        %v480 = vadd.f32 %v325, %v479
        %v481 = vpop.f32.mrb[0].mxu0
        %v482 = vadd.f32 %v321, %v481
        %v483 = vpop.f32.mrb[0].mxu0
        %v484 = vadd.f32 %v325, %v483
        %485 = vmatprep.mubr.bf16.mxu0 0
        %486 = vmatmul.mubr.bf16.gmra.mrb[0].mxu0 %v402
        %v487 = vpop.f32.mrb[0].mxu0
        %v488 = vadd.f32 %v321, %v487
        %v489 = vpop.f32.mrb[0].mxu0
        %v490 = vadd.f32 %v325, %v489
        %v491 = vpop.f32.mrb[0].mxu0
        %v492 = vadd.f32 %v321, %v491
        %v493 = vpop.f32.mrb[0].mxu0
        %v494 = vadd.f32 %v325, %v493
        %495 = vmatprep.mubr.bf16.mxu0 0
        %496 = vmatmul.mubr.bf16.gmra.mrb[0].mxu0 %v405
        %v497 = vpop.f32.mrb[0].mxu0
        %v498 = vadd.f32 %v321, %v497
        %v499 = vpop.f32.mrb[0].mxu0
        %v500 = vadd.f32 %v325, %v499
        %v501 = vpop.f32.mrb[0].mxu0
        %v502 = vadd.f32 %v321, %v501
        %v503 = vpop.f32.mrb[0].mxu0
        %v504 = vadd.f32 %v325, %v503
        %505 = vmatprep.mubr.bf16.mxu0 0
        %506 = vmatmul.mubr.bf16.gmra.mrb[0].mxu0 %v408
        %v507 = vpop.f32.mrb[0].mxu0
        %v508 = vadd.f32 %v321, %v507
        %v509 = vpop.f32.mrb[0].mxu0
        %v510 = vadd.f32 %v325, %v509
        %v511 = vpop.f32.mrb[0].mxu0
        %v512 = vadd.f32 %v321, %v511
        %v513 = vpop.f32.mrb[0].mxu0
        %v514 = vadd.f32 %v325, %v513
        %515 = vmatprep.mubr.bf16.mxu0 0
        %516 = vmatmul.mubr.bf16.gmra.mrb[0].mxu0 %v411
        %v517 = vpop.f32.mrb[0].mxu0
        %v518 = vadd.f32 %v321, %v517
        %v519 = vpop.f32.mrb[0].mxu0
        %v520 = vadd.f32 %v325, %v519
        %v521 = vpop.f32.mrb[0].mxu0
        %v522 = vadd.f32 %v321, %v521
        %v523 = vpop.f32.mrb[0].mxu0
        %v524 = vadd.f32 %v325, %v523
        %525 = vdwg.mxu0
        %v526 = vmax.f32 %v448, 0.0
        %v527 = vmax.f32 %v450, 0.0
        %v528 = vmax.f32 %v452, 0.0
        %v529 = vmax.f32 %v454, 0.0
        %v530 = vmax.f32 %v458, 0.0
        %v531 = vmax.f32 %v460, 0.0
        %v532 = vmax.f32 %v462, 0.0
        %v533 = vmax.f32 %v464, 0.0
        %v534 = vmax.f32 %v468, 0.0
        %v535 = vmax.f32 %v470, 0.0
        %v536 = vmax.f32 %v472, 0.0
        %v537 = vmax.f32 %v474, 0.0
        %v538 = vmax.f32 %v478, 0.0
        %v539 = vmax.f32 %v480, 0.0
        %v540 = vmax.f32 %v482, 0.0
        %v541 = vmax.f32 %v484, 0.0
        %v542 = vmax.f32 %v488, 0.0
        %v543 = vmax.f32 %v490, 0.0
        %v544 = vmax.f32 %v492, 0.0
        %v545 = vmax.f32 %v494, 0.0
        %v546 = vmax.f32 %v498, 0.0
        %v547 = vmax.f32 %v500, 0.0
        %v548 = vmax.f32 %v502, 0.0
        %v549 = vmax.f32 %v504, 0.0
        %v550 = vmax.f32 %v508, 0.0
        %v551 = vmax.f32 %v510, 0.0
        %v552 = vmax.f32 %v512, 0.0
        %v553 = vmax.f32 %v514, 0.0
        %v554 = vmax.f32 %v518, 0.0
        %v555 = vmax.f32 %v520, 0.0
        %v556 = vmax.f32 %v522, 0.0
        %v557 = vmax.f32 %v524, 0.0
        %v558 = vpack.c.bf16 %v528, %v526
        %v559 = vpack.c.bf16 %v529, %v527
        %v560 = vpack.c.bf16 %v532, %v530
        %v561 = vpack.c.bf16 %v533, %v531
        %v562 = vpack.c.bf16 %v536, %v534
        %v563 = vpack.c.bf16 %v537, %v535
        %v564 = vpack.c.bf16 %v540, %v538
        %v565 = vpack.c.bf16 %v541, %v539
        %v566 = vpack.c.bf16 %v544, %v542
        %v567 = vpack.c.bf16 %v545, %v543
        %v568 = vpack.c.bf16 %v548, %v546
        %v569 = vpack.c.bf16 %v549, %v547
        %v570 = vpack.c.bf16 %v552, %v550
        %v571 = vpack.c.bf16 %v553, %v551
        %v572 = vpack.c.bf16 %v556, %v554
        %v573 = vpack.c.bf16 %v557, %v555
        %v574 = vld [vmem:[#allocation2] sm:$0xff]
        %v575 = vld [vmem:[#allocation2 + $0x8] sm:$0xff]
        %v576 = vld [vmem:[#allocation2 + $0x10] sm:$0xff]
        %v577 = vld [vmem:[#allocation2 + $0x18] sm:$0xff]
        %v578 = vld [vmem:[#allocation2 + $0x20] sm:$0xff]
        %v579 = vld [vmem:[#allocation2 + $0x28] sm:$0xff]
        %v580 = vld [vmem:[#allocation2 + $0x30] sm:$0xff]
        %v581 = vld [vmem:[#allocation2 + $0x38] sm:$0xff]
        %v582 = vld [vmem:[#allocation2 + $0x40] sm:$0xff]
        %v583 = vld [vmem:[#allocation2 + $0x48] sm:$0xff]
        %v584 = vld [vmem:[#allocation2 + $0x50] sm:$0xff]
        %v585 = vld [vmem:[#allocation2 + $0x58] sm:$0xff]
        %v586 = vld [vmem:[#allocation2 + $0x60] sm:$0xff]
        %v587 = vld [vmem:[#allocation2 + $0x68] sm:$0xff]
        %v588 = vld [vmem:[#allocation2 + $0x70] sm:$0xff]
        %v589 = vld [vmem:[#allocation2 + $0x78] sm:$0xff]
        %v590 = vld [vmem:[#allocation2 + $0x80] sm:$0xff]
        %v591 = vld [vmem:[#allocation2 + $0x88] sm:$0xff]
        %v592 = vld [vmem:[#allocation2 + $0x90] sm:$0xff]
        %v593 = vld [vmem:[#allocation2 + $0x98] sm:$0xff]
        %v594 = vld [vmem:[#allocation2 + $0xa0] sm:$0xff]
        %v595 = vld [vmem:[#allocation2 + $0xa8] sm:$0xff]
        %v596 = vld [vmem:[#allocation2 + $0xb0] sm:$0xff]
        %v597 = vld [vmem:[#allocation2 + $0xb8] sm:$0xff]
        %v598 = vld [vmem:[#allocation2 + $0xc0] sm:$0xff]
        %v599 = vld [vmem:[#allocation2 + $0xc8] sm:$0xff]
        %v600 = vld [vmem:[#allocation2 + $0xd0] sm:$0xff]
        %v601 = vld [vmem:[#allocation2 + $0xd8] sm:$0xff]
        %v602 = vld [vmem:[#allocation2 + $0xe0] sm:$0xff]
        %v603 = vld [vmem:[#allocation2 + $0xe8] sm:$0xff]
        %v604 = vld [vmem:[#allocation2 + $0xf0] sm:$0xff]
        %v605 = vld [vmem:[#allocation2 + $0xf8] sm:$0xff]
        %v606 = vld [vmem:[%s4] sm:$0x3]
        %v608 = vlaneseq
        %v609 = vshrl.u32 %v608, 7
        %v610 = vsub.s32 0, %v609
        %v611 = vrot.slane %v606, %v610
        %v612 = vlaneseq
        %v613 = vshrl.u32 %v612, 7
        %v614 = vsub.s32 1, %v613
        %v615 = vrot.slane %v606, %v614
        %v650 = vunpack.c.l.b16 %v574
        %v651 = vunpack.c.h.b16 %v574
        %v652 = vunpack.c.l.b16 %v575
        %v653 = vunpack.c.h.b16 %v575
        %v654 = vunpack.c.l.b16 %v576
        %v655 = vunpack.c.h.b16 %v576
        %v656 = vunpack.c.l.b16 %v577
        %v657 = vunpack.c.h.b16 %v577
        %v658 = vunpack.c.l.b16 %v578
        %v659 = vunpack.c.h.b16 %v578
        %v660 = vunpack.c.l.b16 %v579
        %v661 = vunpack.c.h.b16 %v579
        %v662 = vunpack.c.l.b16 %v580
        %v663 = vunpack.c.h.b16 %v580
        %v664 = vunpack.c.l.b16 %v581
        %v665 = vunpack.c.h.b16 %v581
        %v666 = vunpack.c.l.b16 %v582
        %v667 = vunpack.c.h.b16 %v582
        %v668 = vunpack.c.l.b16 %v583
        %v669 = vunpack.c.h.b16 %v583
        %v670 = vunpack.c.l.b16 %v584
        %v671 = vunpack.c.h.b16 %v584
        %v672 = vunpack.c.l.b16 %v585
        %v673 = vunpack.c.h.b16 %v585
        %v674 = vunpack.c.l.b16 %v586
        %v675 = vunpack.c.h.b16 %v586
        %v676 = vunpack.c.l.b16 %v587
        %v677 = vunpack.c.h.b16 %v587
        %v678 = vunpack.c.l.b16 %v588
        %v679 = vunpack.c.h.b16 %v588
        %v680 = vunpack.c.l.b16 %v589
        %v681 = vunpack.c.h.b16 %v589
        %v682 = vunpack.c.l.b16 %v590
        %v683 = vunpack.c.h.b16 %v590
        %v684 = vunpack.c.l.b16 %v591
        %v685 = vunpack.c.h.b16 %v591
        %v686 = vunpack.c.l.b16 %v592
        %v687 = vunpack.c.h.b16 %v592
        %v688 = vunpack.c.l.b16 %v593
        %v689 = vunpack.c.h.b16 %v593
        %v690 = vunpack.c.l.b16 %v594
        %v691 = vunpack.c.h.b16 %v594
        %v692 = vunpack.c.l.b16 %v595
        %v693 = vunpack.c.h.b16 %v595
        %v694 = vunpack.c.l.b16 %v596
        %v695 = vunpack.c.h.b16 %v596
        %v696 = vunpack.c.l.b16 %v597
        %v697 = vunpack.c.h.b16 %v597
        %v698 = vunpack.c.l.b16 %v598
        %v699 = vunpack.c.h.b16 %v598
        %v700 = vunpack.c.l.b16 %v599
        %v701 = vunpack.c.h.b16 %v599
        %v702 = vunpack.c.l.b16 %v600
        %v703 = vunpack.c.h.b16 %v600
        %v704 = vunpack.c.l.b16 %v601
        %v705 = vunpack.c.h.b16 %v601
        %v706 = vunpack.c.l.b16 %v602
        %v707 = vunpack.c.h.b16 %v602
        %v708 = vunpack.c.l.b16 %v603
        %v709 = vunpack.c.h.b16 %v603
        %v710 = vunpack.c.l.b16 %v604
        %v711 = vunpack.c.h.b16 %v604
        %v712 = vunpack.c.l.b16 %v605
        %v713 = vunpack.c.h.b16 %v605
        %v714 = vpack.c.b16 %v652, %v650
        %v715 = vpack.c.b16 %v653, %v651
        %v716 = vpack.c.b16 %v656, %v654
        %v717 = vpack.c.b16 %v657, %v655
        %v718 = vpack.c.b16 %v660, %v658
        %v719 = vpack.c.b16 %v661, %v659
        %v720 = vpack.c.b16 %v664, %v662
        %v721 = vpack.c.b16 %v665, %v663
        %v722 = vpack.c.b16 %v668, %v666
        %v723 = vpack.c.b16 %v669, %v667
        %v724 = vpack.c.b16 %v672, %v670
        %v725 = vpack.c.b16 %v673, %v671
        %v726 = vpack.c.b16 %v676, %v674
        %v727 = vpack.c.b16 %v677, %v675
        %v728 = vpack.c.b16 %v680, %v678
        %v729 = vpack.c.b16 %v681, %v679
        %v730 = vpack.c.b16 %v684, %v682
        %v731 = vpack.c.b16 %v685, %v683
        %v732 = vpack.c.b16 %v688, %v686
        %v733 = vpack.c.b16 %v689, %v687
        %v734 = vpack.c.b16 %v692, %v690
        %v735 = vpack.c.b16 %v693, %v691
        %v736 = vpack.c.b16 %v696, %v694
        %v737 = vpack.c.b16 %v697, %v695
        %v738 = vpack.c.b16 %v700, %v698
        %v739 = vpack.c.b16 %v701, %v699
        %v740 = vpack.c.b16 %v704, %v702
        %v741 = vpack.c.b16 %v705, %v703
        %v742 = vpack.c.b16 %v708, %v706
        %v743 = vpack.c.b16 %v709, %v707
        %v744 = vpack.c.b16 %v712, %v710
        %v745 = vpack.c.b16 %v713, %v711
        %778 = vmatprep.subr.bf16.mxu0 %v715
        %779 = vmatpush1.bf16.msra.mxu0 %v714
        %780 = vmatprep.subr.bf16.mxu0 %v717
        %781 = vmatpush1.bf16.msra.mxu0 %v716
        %782 = vmatprep.subr.bf16.mxu0 %v719
        %783 = vmatpush1.bf16.msra.mxu0 %v718
        %784 = vmatprep.subr.bf16.mxu0 %v721
        %785 = vmatpush1.bf16.msra.mxu0 %v720
        %786 = vmatprep.subr.bf16.mxu0 %v723
        %787 = vmatpush1.bf16.msra.mxu0 %v722
        %788 = vmatprep.subr.bf16.mxu0 %v725
        %789 = vmatpush1.bf16.msra.mxu0 %v724
        %790 = vmatprep.subr.bf16.mxu0 %v727
        %791 = vmatpush1.bf16.msra.mxu0 %v726
        %792 = vmatprep.subr.bf16.mxu0 %v729
        %793 = vmatpush1.bf16.msra.mxu0 %v728
        %794 = vmatprep.subr.bf16.mxu0 %v731
        %795 = vmatpush1.bf16.msra.mxu0 %v730
        %796 = vmatprep.subr.bf16.mxu0 %v733
        %797 = vmatpush1.bf16.msra.mxu0 %v732
        %798 = vmatprep.subr.bf16.mxu0 %v735
        %799 = vmatpush1.bf16.msra.mxu0 %v734
        %800 = vmatprep.subr.bf16.mxu0 %v737
        %801 = vmatpush1.bf16.msra.mxu0 %v736
        %802 = vmatprep.subr.bf16.mxu0 %v739
        %803 = vmatpush1.bf16.msra.mxu0 %v738
        %804 = vmatprep.subr.bf16.mxu0 %v741
        %805 = vmatpush1.bf16.msra.mxu0 %v740
        %806 = vmatprep.subr.bf16.mxu0 %v743
        %807 = vmatpush1.bf16.msra.mxu0 %v742
        %808 = vmatprep.subr.bf16.mxu0 %v745
        %809 = vmatpush1.bf16.msra.mxu0 %v744
        %810 = vmatprep.mubr.bf16.mxu0 %v559
        %811 = vmatmul.mubr.bf16.gmra.mrb[0].mxu0 %v558
        %v812 = vpop.f32.mrb[0].mxu0
        %v813 = vadd.f32 %v611, %v812
        %v814 = vpop.f32.mrb[0].mxu0
        %v815 = vadd.f32 %v615, %v814
        %v816 = vpop.f32.mrb[0].mxu0
        %v817 = vadd.f32 %v611, %v816
        %v818 = vpop.f32.mrb[0].mxu0
        %v819 = vadd.f32 %v615, %v818
        %820 = vmatprep.mubr.bf16.mxu0 %v561
        %821 = vmatmul.mubr.bf16.gmra.mrb[0].mxu0 %v560
        %v822 = vpop.f32.mrb[0].mxu0
        %v823 = vadd.f32 %v611, %v822
        %v824 = vpop.f32.mrb[0].mxu0
        %v825 = vadd.f32 %v615, %v824
        %v826 = vpop.f32.mrb[0].mxu0
        %v827 = vadd.f32 %v611, %v826
        %v828 = vpop.f32.mrb[0].mxu0
        %v829 = vadd.f32 %v615, %v828
        %830 = vmatprep.mubr.bf16.mxu0 %v563
        %831 = vmatmul.mubr.bf16.gmra.mrb[0].mxu0 %v562
        %v832 = vpop.f32.mrb[0].mxu0
        %v833 = vadd.f32 %v611, %v832
        %v834 = vpop.f32.mrb[0].mxu0
        %v835 = vadd.f32 %v615, %v834
        %v836 = vpop.f32.mrb[0].mxu0
        %v837 = vadd.f32 %v611, %v836
        %v838 = vpop.f32.mrb[0].mxu0
        %v839 = vadd.f32 %v615, %v838
        %840 = vmatprep.mubr.bf16.mxu0 %v565
        %841 = vmatmul.mubr.bf16.gmra.mrb[0].mxu0 %v564
        %v842 = vpop.f32.mrb[0].mxu0
        %v843 = vadd.f32 %v611, %v842
        %v844 = vpop.f32.mrb[0].mxu0
        %v845 = vadd.f32 %v615, %v844
        %v846 = vpop.f32.mrb[0].mxu0
        %v847 = vadd.f32 %v611, %v846
        %v848 = vpop.f32.mrb[0].mxu0
        %v849 = vadd.f32 %v615, %v848
        %850 = vmatprep.mubr.bf16.mxu0 %v567
        %851 = vmatmul.mubr.bf16.gmra.mrb[0].mxu0 %v566
        %v852 = vpop.f32.mrb[0].mxu0
        %v853 = vadd.f32 %v611, %v852
        %v854 = vpop.f32.mrb[0].mxu0
        %v855 = vadd.f32 %v615, %v854
        %v856 = vpop.f32.mrb[0].mxu0
        %v857 = vadd.f32 %v611, %v856
        %v858 = vpop.f32.mrb[0].mxu0
        %v859 = vadd.f32 %v615, %v858
        %860 = vmatprep.mubr.bf16.mxu0 %v569
        %861 = vmatmul.mubr.bf16.gmra.mrb[0].mxu0 %v568
        %v862 = vpop.f32.mrb[0].mxu0
        %v863 = vadd.f32 %v611, %v862
        %v864 = vpop.f32.mrb[0].mxu0
        %v865 = vadd.f32 %v615, %v864
        %v866 = vpop.f32.mrb[0].mxu0
        %v867 = vadd.f32 %v611, %v866
        %v868 = vpop.f32.mrb[0].mxu0
        %v869 = vadd.f32 %v615, %v868
        %870 = vmatprep.mubr.bf16.mxu0 %v571
        %871 = vmatmul.mubr.bf16.gmra.mrb[0].mxu0 %v570
        %v872 = vpop.f32.mrb[0].mxu0
        %v873 = vadd.f32 %v611, %v872
        %v874 = vpop.f32.mrb[0].mxu0
        %v875 = vadd.f32 %v615, %v874
        %v876 = vpop.f32.mrb[0].mxu0
        %v877 = vadd.f32 %v611, %v876
        %v878 = vpop.f32.mrb[0].mxu0
        %v879 = vadd.f32 %v615, %v878
        %880 = vmatprep.mubr.bf16.mxu0 %v573
        %881 = vmatmul.mubr.bf16.gmra.mrb[0].mxu0 %v572
        %v882 = vpop.f32.mrb[0].mxu0
        %v883 = vadd.f32 %v611, %v882
        %v884 = vpop.f32.mrb[0].mxu0
        %v885 = vadd.f32 %v615, %v884
        %v886 = vpop.f32.mrb[0].mxu0
        %v887 = vadd.f32 %v611, %v886
        %v888 = vpop.f32.mrb[0].mxu0
        %v889 = vadd.f32 %v615, %v888
        %890 = vdwg.mxu0
        %v891 = vmax.f32 %v813, 0.0
        %v892 = vmax.f32 %v815, 0.0
        %v893 = vmax.f32 %v817, 0.0
        %v894 = vmax.f32 %v819, 0.0
        %v895 = vmax.f32 %v823, 0.0
        %v896 = vmax.f32 %v825, 0.0
        %v897 = vmax.f32 %v827, 0.0
        %v898 = vmax.f32 %v829, 0.0
        %v899 = vmax.f32 %v833, 0.0
        %v900 = vmax.f32 %v835, 0.0
        %v901 = vmax.f32 %v837, 0.0
        %v902 = vmax.f32 %v839, 0.0
        %v903 = vmax.f32 %v843, 0.0
        %v904 = vmax.f32 %v845, 0.0
        %v905 = vmax.f32 %v847, 0.0
        %v906 = vmax.f32 %v849, 0.0
        %v907 = vmax.f32 %v853, 0.0
        %v908 = vmax.f32 %v855, 0.0
        %v909 = vmax.f32 %v857, 0.0
        %v910 = vmax.f32 %v859, 0.0
        %v911 = vmax.f32 %v863, 0.0
        %v912 = vmax.f32 %v865, 0.0
        %v913 = vmax.f32 %v867, 0.0
        %v914 = vmax.f32 %v869, 0.0
        %v915 = vmax.f32 %v873, 0.0
        %v916 = vmax.f32 %v875, 0.0
        %v917 = vmax.f32 %v877, 0.0
        %v918 = vmax.f32 %v879, 0.0
        %v919 = vmax.f32 %v883, 0.0
        %v920 = vmax.f32 %v885, 0.0
        %v921 = vmax.f32 %v887, 0.0
        %v922 = vmax.f32 %v889, 0.0
        %v923 = vpack.c.bf16 %v893, %v891
        %v924 = vpack.c.bf16 %v894, %v892
        %v925 = vpack.c.bf16 %v897, %v895
        %v926 = vpack.c.bf16 %v898, %v896
        %v927 = vpack.c.bf16 %v901, %v899
        %v928 = vpack.c.bf16 %v902, %v900
        %v929 = vpack.c.bf16 %v905, %v903
        %v930 = vpack.c.bf16 %v906, %v904
        %v931 = vpack.c.bf16 %v909, %v907
        %v932 = vpack.c.bf16 %v910, %v908
        %v933 = vpack.c.bf16 %v913, %v911
        %v934 = vpack.c.bf16 %v914, %v912
        %v935 = vpack.c.bf16 %v917, %v915
        %v936 = vpack.c.bf16 %v918, %v916
        %v937 = vpack.c.bf16 %v921, %v919
        %v938 = vpack.c.bf16 %v922, %v920
        %v939 = vld [vmem:[%s5] sm:$0xf]
        %v940 = vld [vmem:[%s5 + $0x4] sm:$0xf]
        %v941 = vld [vmem:[%s5 + $0x8] sm:$0xf]
        %v942 = vld [vmem:[%s5 + $0xc] sm:$0xf]
        %v943 = vld [vmem:[%s5 + $0x10] sm:$0xf]
        %v944 = vld [vmem:[%s5 + $0x14] sm:$0xf]
        %v945 = vld [vmem:[%s5 + $0x18] sm:$0xf]
        %v946 = vld [vmem:[%s5 + $0x1c] sm:$0xf]
        %v947 = vld [vmem:[%s5 + $0x20] sm:$0xf]
        %v948 = vld [vmem:[%s5 + $0x24] sm:$0xf]
        %v949 = vld [vmem:[%s5 + $0x28] sm:$0xf]
        %v950 = vld [vmem:[%s5 + $0x2c] sm:$0xf]
        %v951 = vld [vmem:[%s5 + $0x30] sm:$0xf]
        %v952 = vld [vmem:[%s5 + $0x34] sm:$0xf]
        %v953 = vld [vmem:[%s5 + $0x38] sm:$0xf]
        %v954 = vld [vmem:[%s5 + $0x3c] sm:$0xf]
        %v955 = vld [vmem:[%s5 + $0x40] sm:$0xf]
        %v956 = vld [vmem:[%s5 + $0x44] sm:$0xf]
        %v957 = vld [vmem:[%s5 + $0x48] sm:$0xf]
        %v958 = vld [vmem:[%s5 + $0x4c] sm:$0xf]
        %v959 = vld [vmem:[%s5 + $0x50] sm:$0xf]
        %v960 = vld [vmem:[%s5 + $0x54] sm:$0xf]
        %v961 = vld [vmem:[%s5 + $0x58] sm:$0xf]
        %v962 = vld [vmem:[%s5 + $0x5c] sm:$0xf]
        %v963 = vld [vmem:[%s5 + $0x60] sm:$0xf]
        %v964 = vld [vmem:[%s5 + $0x64] sm:$0xf]
        %v965 = vld [vmem:[%s5 + $0x68] sm:$0xf]
        %v966 = vld [vmem:[%s5 + $0x6c] sm:$0xf]
        %v967 = vld [vmem:[%s5 + $0x70] sm:$0xf]
        %v968 = vld [vmem:[%s5 + $0x74] sm:$0xf]
        %v969 = vld [vmem:[%s5 + $0x78] sm:$0xf]
        %v970 = vld [vmem:[%s5 + $0x7c] sm:$0xf]
        %v971 = vld [vmem:[%s6] sm:$0x1]
        %v973 = vlaneseq
        %v974 = vshrl.u32 %v973, 7
        %v975 = vsub.s32 0, %v974
        %v976 = vrot.slane %v971, %v975
        %v1010 = vunpack.c.l.b16 %v939
        %v1011 = vunpack.c.l.b16 %v940
        %v1012 = vunpack.c.l.b16 %v941
        %v1013 = vunpack.c.l.b16 %v942
        %v1014 = vunpack.c.l.b16 %v943
        %v1015 = vunpack.c.l.b16 %v944
        %v1016 = vunpack.c.l.b16 %v945
        %v1017 = vunpack.c.l.b16 %v946
        %v1018 = vunpack.c.l.b16 %v947
        %v1019 = vunpack.c.l.b16 %v948
        %v1020 = vunpack.c.l.b16 %v949
        %v1021 = vunpack.c.l.b16 %v950
        %v1022 = vunpack.c.l.b16 %v951
        %v1023 = vunpack.c.l.b16 %v952
        %v1024 = vunpack.c.l.b16 %v953
        %v1025 = vunpack.c.l.b16 %v954
        %v1026 = vunpack.c.l.b16 %v955
        %v1027 = vunpack.c.l.b16 %v956
        %v1028 = vunpack.c.l.b16 %v957
        %v1029 = vunpack.c.l.b16 %v958
        %v1030 = vunpack.c.l.b16 %v959
        %v1031 = vunpack.c.l.b16 %v960
        %v1032 = vunpack.c.l.b16 %v961
        %v1033 = vunpack.c.l.b16 %v962
        %v1034 = vunpack.c.l.b16 %v963
        %v1035 = vunpack.c.l.b16 %v964
        %v1036 = vunpack.c.l.b16 %v965
        %v1037 = vunpack.c.l.b16 %v966
        %v1038 = vunpack.c.l.b16 %v967
        %v1039 = vunpack.c.l.b16 %v968
        %v1040 = vunpack.c.l.b16 %v969
        %v1041 = vunpack.c.l.b16 %v970
        %v1042 = vpack.c.b16 %v1011, %v1010
        %v1043 = vpack.c.b16 %v1013, %v1012
        %v1044 = vpack.c.b16 %v1015, %v1014
        %v1045 = vpack.c.b16 %v1017, %v1016
        %v1046 = vpack.c.b16 %v1019, %v1018
        %v1047 = vpack.c.b16 %v1021, %v1020
        %v1048 = vpack.c.b16 %v1023, %v1022
        %v1049 = vpack.c.b16 %v1025, %v1024
        %v1050 = vpack.c.b16 %v1027, %v1026
        %v1051 = vpack.c.b16 %v1029, %v1028
        %v1052 = vpack.c.b16 %v1031, %v1030
        %v1053 = vpack.c.b16 %v1033, %v1032
        %v1054 = vpack.c.b16 %v1035, %v1034
        %v1055 = vpack.c.b16 %v1037, %v1036
        %v1056 = vpack.c.b16 %v1039, %v1038
        %v1057 = vpack.c.b16 %v1041, %v1040
        %1074 = vmatprep.subr.bf16.mxu0 0
        %1075 = vmatpush1.bf16.msra.mxu0 %v1042
        %1076 = vmatprep.subr.bf16.mxu0 0
        %1077 = vmatpush1.bf16.msra.mxu0 %v1043
        %1078 = vmatprep.subr.bf16.mxu0 0
        %1079 = vmatpush1.bf16.msra.mxu0 %v1044
        %1080 = vmatprep.subr.bf16.mxu0 0
        %1081 = vmatpush1.bf16.msra.mxu0 %v1045
        %1082 = vmatprep.subr.bf16.mxu0 0
        %1083 = vmatpush1.bf16.msra.mxu0 %v1046
        %1084 = vmatprep.subr.bf16.mxu0 0
        %1085 = vmatpush1.bf16.msra.mxu0 %v1047
        %1086 = vmatprep.subr.bf16.mxu0 0
        %1087 = vmatpush1.bf16.msra.mxu0 %v1048
        %1088 = vmatprep.subr.bf16.mxu0 0
        %1089 = vmatpush1.bf16.msra.mxu0 %v1049
        %1090 = vmatprep.subr.bf16.mxu0 0
        %1091 = vmatpush1.bf16.msra.mxu0 %v1050
        %1092 = vmatprep.subr.bf16.mxu0 0
        %1093 = vmatpush1.bf16.msra.mxu0 %v1051
        %1094 = vmatprep.subr.bf16.mxu0 0
        %1095 = vmatpush1.bf16.msra.mxu0 %v1052
        %1096 = vmatprep.subr.bf16.mxu0 0
        %1097 = vmatpush1.bf16.msra.mxu0 %v1053
        %1098 = vmatprep.subr.bf16.mxu0 0
        %1099 = vmatpush1.bf16.msra.mxu0 %v1054
        %1100 = vmatprep.subr.bf16.mxu0 0
        %1101 = vmatpush1.bf16.msra.mxu0 %v1055
        %1102 = vmatprep.subr.bf16.mxu0 0
        %1103 = vmatpush1.bf16.msra.mxu0 %v1056
        %1104 = vmatprep.subr.bf16.mxu0 0
        %1105 = vmatpush1.bf16.msra.mxu0 %v1057
        %1106 = vmatprep.mubr.bf16.mxu0 %v924
        %1107 = vmatmul.mubr.bf16.gmra.mrb[0].mxu0 %v923
        %v1108 = vpop.f32.mrb[0].mxu0
        %v1109 = vadd.f32 %v976, %v1108
        %v1110 = vpop.f32.mrb[0].mxu0
        %v1111 = vpop.f32.mrb[0].mxu0
        %v1112 = vadd.f32 %v976, %v1111
        %v1113 = vpop.f32.mrb[0].mxu0
        %1114 = vmatprep.mubr.bf16.mxu0 %v926
        %1115 = vmatmul.mubr.bf16.gmra.mrb[0].mxu0 %v925
        %v1116 = vpop.f32.mrb[0].mxu0
        %v1117 = vadd.f32 %v976, %v1116
        %v1118 = vpop.f32.mrb[0].mxu0
        %v1119 = vpop.f32.mrb[0].mxu0
        %v1120 = vadd.f32 %v976, %v1119
        %v1121 = vpop.f32.mrb[0].mxu0
        %1122 = vmatprep.mubr.bf16.mxu0 %v928
        %1123 = vmatmul.mubr.bf16.gmra.mrb[0].mxu0 %v927
        %v1124 = vpop.f32.mrb[0].mxu0
        %v1125 = vadd.f32 %v976, %v1124
        %v1126 = vpop.f32.mrb[0].mxu0
        %v1127 = vpop.f32.mrb[0].mxu0
        %v1128 = vadd.f32 %v976, %v1127
        %v1129 = vpop.f32.mrb[0].mxu0
        %1130 = vmatprep.mubr.bf16.mxu0 %v930
        %1131 = vmatmul.mubr.bf16.gmra.mrb[0].mxu0 %v929
        %v1132 = vpop.f32.mrb[0].mxu0
        %v1133 = vadd.f32 %v976, %v1132
        %v1134 = vpop.f32.mrb[0].mxu0
        %v1135 = vpop.f32.mrb[0].mxu0
        %v1136 = vadd.f32 %v976, %v1135
        %v1137 = vpop.f32.mrb[0].mxu0
        %1138 = vmatprep.mubr.bf16.mxu0 %v932
        %1139 = vmatmul.mubr.bf16.gmra.mrb[0].mxu0 %v931
        %v1140 = vpop.f32.mrb[0].mxu0
        %v1141 = vadd.f32 %v976, %v1140
        %v1142 = vpop.f32.mrb[0].mxu0
        %v1143 = vpop.f32.mrb[0].mxu0
        %v1144 = vadd.f32 %v976, %v1143
        %v1145 = vpop.f32.mrb[0].mxu0
        %1146 = vmatprep.mubr.bf16.mxu0 %v934
        %1147 = vmatmul.mubr.bf16.gmra.mrb[0].mxu0 %v933
        %v1148 = vpop.f32.mrb[0].mxu0
        %v1149 = vadd.f32 %v976, %v1148
        %v1150 = vpop.f32.mrb[0].mxu0
        %v1151 = vpop.f32.mrb[0].mxu0
        %v1152 = vadd.f32 %v976, %v1151
        %v1153 = vpop.f32.mrb[0].mxu0
        %1154 = vmatprep.mubr.bf16.mxu0 %v936
        %1155 = vmatmul.mubr.bf16.gmra.mrb[0].mxu0 %v935
        %v1156 = vpop.f32.mrb[0].mxu0
        %v1157 = vadd.f32 %v976, %v1156
        %v1158 = vpop.f32.mrb[0].mxu0
        %v1159 = vpop.f32.mrb[0].mxu0
        %v1160 = vadd.f32 %v976, %v1159
        %v1161 = vpop.f32.mrb[0].mxu0
        %1162 = vmatprep.mubr.bf16.mxu0 %v938
        %1163 = vmatmul.mubr.bf16.gmra.mrb[0].mxu0 %v937
        %v1164 = vpop.f32.mrb[0].mxu0
        %v1165 = vadd.f32 %v976, %v1164
        %v1166 = vpop.f32.mrb[0].mxu0
        %v1167 = vpop.f32.mrb[0].mxu0
        %v1168 = vadd.f32 %v976, %v1167
        %v1169 = vpop.f32.mrb[0].mxu0
        %1170 = vdwg.mxu0
        %1171 = vst [vmem:[%s287] sm:$0xff] %v1109
        %1172 = vst [vmem:[%s287 + $0x8] sm:$0xff] %v1112
        %1173 = vst [vmem:[%s287 + $0x10] sm:$0xff] %v1117
        %1174 = vst [vmem:[%s287 + $0x18] sm:$0xff] %v1120
        %1175 = vst [vmem:[%s287 + $0x20] sm:$0xff] %v1125
        %1176 = vst [vmem:[%s287 + $0x28] sm:$0xff] %v1128
        %1177 = vst [vmem:[%s287 + $0x30] sm:$0xff] %v1133
        %1178 = vst [vmem:[%s287 + $0x38] sm:$0xff] %v1136
        %1179 = vst [vmem:[%s287 + $0x40] sm:$0xff] %v1141
        %1180 = vst [vmem:[%s287 + $0x48] sm:$0xff] %v1144
        %1181 = vst [vmem:[%s287 + $0x50] sm:$0xff] %v1149
        %1182 = vst [vmem:[%s287 + $0x58] sm:$0xff] %v1152
        %1183 = vst [vmem:[%s287 + $0x60] sm:$0xff] %v1157
        %1184 = vst [vmem:[%s287 + $0x68] sm:$0xff] %v1160
        %1185 = vst [vmem:[%s287 + $0x70] sm:$0xff] %v1165
        %1186 = vst [vmem:[%s287 + $0x78] sm:$0xff] %v1168
        %s1187 = sand.u32 %s182, 1
        %s1188 = scalar_lea.sflag [#allocation4], %s1187
        %s1189 = sand.u32 %s182, 1
        %s1190 = smul.addr %s1189, 128
        %s1191 = scalar_lea.vmem [#allocation5], %s1190
        // Predicated region
        $region53: #{tpu_custom_call.1} parent=47 // pred_check
          %p1192 = pneg %p192
        $region54: #{tpu_custom_call.1} parent=47 // pred_check_branch
          %1194 = sbr.rel (%p1192) target = $region56
        $region55: #{tpu_custom_call.1} parent=47 // pred_region
          %s1195 = smul.u32 16, %s22
          %s1197 = ssub.s32 2048, 2048
          %1198 = vsyncadd %s1188, %s1197
          %s1199 = smul.addr %s1195, 128
          %s1200 = scalar_lea.hbm %s7, %s1199
          %s1201 = sshll.u32 %s1191, 4
          %s1202 = int_to_ptr.vmem [resolvable:$true] %s1201
          %1207 = dma.vmem_to_hbm [thread:$0]  %s1202, 2048, %s1200, %s1188, 128, 128, 8
        $region56: #{tpu_custom_call.1} parent=47 // pred_fallthru
          _
      $region48: #{tpu_custom_call.1} parent=5 // pred_fallthru
        _
      %p1208 = scmp.le.s32.totalorder 2, %s17
      // Predicated region
      $region57: #{tpu_custom_call.1} parent=5 // pred_check
        %p1209 = pneg %p1208
      $region58: #{tpu_custom_call.1} parent=5 // pred_check_branch
        %1211 = sbr.rel (%p1209) target = $region60
      $region59: #{tpu_custom_call.1} parent=5 // pred_region
        %s1212 = ssub.s32 %s17, 2
        // Predicated region
        $region61: #{tpu_custom_call.1} parent=59 // pred_check
          %p1213 = pneg %p198
        $region62: #{tpu_custom_call.1} parent=59 // pred_check_branch
          %1215 = sbr.rel (%p1213) target = $region64
        $region63: #{tpu_custom_call.1} parent=59 // pred_region
          %s1216 = sand.u32 %s183, 1
          %s1217 = scalar_lea.sflag [#allocation4], %s1216
          %s1218 = sand.u32 %s183, 1
          %s1219 = smul.addr %s1218, 128
          %s1220 = scalar_lea.vmem [#allocation5], %s1219
          %1221 = dma.done %s1217, 2048
        $region64: #{tpu_custom_call.1} parent=59 // pred_fallthru
          _
      $region60: #{tpu_custom_call.1} parent=5 // pred_fallthru
        _
    $region6: #{tpu_custom_call.1} parent=1 // loop_footer
      %s21 = sadd.s32 1, %s17
    $region7: #{tpu_custom_call.1} parent=1 // loop_footer_branch
      %16 = sbr.rel target = $region3
    $region8: #{tpu_custom_call.1} parent=1 // loop_exit
      _
    %1222 = vsyncpa [#allocation3], 1
    %s1223 = scalar_lea.sflag [#allocation3], 1
    %1224 = vsyncpa %s1223, 1
    %1225 = vsyncpa [#allocation4], 1
    %s1226 = scalar_lea.sflag [#allocation4], 1
    %1227 = vsyncpa %s1226, 1

</llo_original>
